<compile_context>
chip_gen: v5e
topology: v5e:2x2
jax: 0.10.0
libtpu: 0.0.40
codegen_flags: <defaults>
</compile_context>

<pallas_src>
import functools

import jax
import jax.numpy as jnp
from jax.experimental import pallas as pl
from jax.experimental.pallas import tpu as pltpu


# ----------------------------------------------------------------------------
# Kernels: MXU field-sum variant (D not lane-aligned)
# ----------------------------------------------------------------------------
def _fm_reduced_mxu_kernel(x_ref, smat_ref, o_ref):
    # x_ref: (TB, F*D) lane-dense block; smat_ref: (F*D, D) stacked identity.
    x = x_ref[...]
    # Field sum on the (otherwise idle) MXU, full-precision f32 accumulate.
    s = jnp.dot(x, smat_ref[...],
                preferred_element_type=jnp.float32,
                precision=jax.lax.Precision.HIGHEST)          # (TB, D)
    # Sum of squares over the whole slab in one vreg-wide pass (consumed
    # immediately; no f32 slab live across any unrolled loop).
    xf = x.astype(jnp.float32)
    sos = jnp.sum(xf * xf, axis=1, keepdims=True)             # (TB, 1)
    ix = jnp.sum(s * s, axis=1, keepdims=True) - sos          # (TB, 1)
    o_ref[...] = (0.5 * ix).astype(o_ref.dtype)


def _fm_full_mxu_kernel(x_ref, smat_ref, o_ref):
    # x_ref: (TB, F*D); smat_ref: (F*D, D); o_ref: (TB, D)
    x = x_ref[...]
    smat = smat_ref[...]
    s = jnp.dot(x, smat, preferred_element_type=jnp.float32,
                precision=jax.lax.Precision.HIGHEST)          # (TB, D)
    ss = jnp.dot(x * x, smat, preferred_element_type=jnp.float32,
                 precision=jax.lax.Precision.HIGHEST)         # (TB, D)
    o_ref[...] = (0.5 * (s * s - ss)).astype(o_ref.dtype)


# ----------------------------------------------------------------------------
# Kernels: static-Ref-slice variant (D lane-aligned, slices are free)
# ----------------------------------------------------------------------------
def _fm_reduced_slice_kernel(x_ref, o_ref, *, num_fields, embed_dim):
    F, D = num_fields, embed_dim
    # Static Ref slices, upcast per field: only one (TB, D) f32 accumulator.
    s = x_ref[:, 0:D].astype(jnp.float32)
    for f in range(1, F):
        s = s + x_ref[:, f * D:(f + 1) * D].astype(jnp.float32)
    xf = x_ref[...].astype(jnp.float32)
    sos = jnp.sum(xf * xf, axis=1, keepdims=True)             # (TB, 1)
    ix = jnp.sum(s * s, axis=1, keepdims=True) - sos
    o_ref[...] = (0.5 * ix).astype(o_ref.dtype)


def _fm_full_slice_kernel(x_ref, o_ref, *, num_fields, embed_dim):
    F, D = num_fields, embed_dim
    x0 = x_ref[:, 0:D].astype(jnp.float32)
    s = x0
    ss = x0 * x0
    for f in range(1, F):
        xf = x_ref[:, f * D:(f + 1) * D].astype(jnp.float32)
        s = s + xf
        ss = ss + xf * xf
    o_ref[...] = (0.5 * (s * s - ss)).astype(o_ref.dtype)


# ----------------------------------------------------------------------------
# Wrapper helpers
# ----------------------------------------------------------------------------
def _round_up(n, m):
    return ((n + m - 1) // m) * m


def _generation_budget():
    """(target input-block bytes, scoped-VMEM limit bytes), per generation."""
    try:
        vmem_bytes = int(pltpu.get_tpu_info().vmem_capacity_bytes)
    except Exception:
        vmem_bytes = 64 * 1024 * 1024          # conservative: v7x-sized VMEM
    if vmem_bytes >= 128 * 1024 * 1024:        # v5e / v6e (128 MiB physical)
        return 8 * 1024 * 1024, 64 * 1024 * 1024
    return 4 * 1024 * 1024, 32 * 1024 * 1024   # v7x (64 MiB physical)


def _choose_batch_tile(B, fd, itemsize, target_block_bytes):
    """Batch tile TB: ~target_block_bytes per input block (x2 for the double
    buffer) - big enough to amortize the ~0.35us per-grid-step overhead."""
    row_bytes = _round_up(fd, 128) * itemsize
    max_tb = max(1, target_block_bytes // row_bytes)
    if B <= max_tb:
        # Whole batch in one block; "block dim == full array dim" is always a
        # legal block shape regardless of B.
        return int(B)
    # Multiples of 256 satisfy every dtype's sublane tile (8 / 16 / 32).
    tb = (max_tb // 256) * 256
    if tb == 0:
        # Very wide rows: fall back to the dtype's minimal sublane tile.
        sub = {4: 8, 2: 16, 1: 32}.get(itemsize, 32)
        tb = max(sub, (max_tb // sub) * sub)
    return int(tb)


# ----------------------------------------------------------------------------
# Public entry point
# ----------------------------------------------------------------------------
def fm_operation(x, reduce_sum=True, core_parallel=False):
    """FM pairwise-interaction. x: (batch, num_fields, embed_dim) float array.

    core_parallel: set True on v7x if an xprof trace shows only one of the two
    TensorCores streaming (plain "parallel" may not split a 1-D grid).
    """
    B, F, D = x.shape
    fd = F * D
    # Lane-dense slab: collapse (F, D) so small F / D avoid (8,128) padding.
    x2 = x.reshape(B, fd)
    itemsize = jnp.dtype(x2.dtype).itemsize

    target_block_bytes, vmem_limit = _generation_budget()
    TB = _choose_batch_tile(B, fd, itemsize, target_block_bytes)
    grid = (pl.cdiv(B, TB),)

    # Field-sum strategy: MXU offload when per-field lane slices would be
    # misaligned (D % 128 != 0) and the resident identity matrix stays small;
    # otherwise the aligned static-slice loop.
    smat_bytes = fd * D * itemsize
    use_mxu = (F > 1) and (D % 128 != 0) and (smat_bytes <= 4 * 1024 * 1024)

    in_specs = [pl.BlockSpec((TB, fd), lambda i: (i, 0))]
    args = [x2]
    if use_mxu:
        smat = jnp.tile(jnp.eye(D, dtype=x2.dtype), (F, 1))        # (F*D, D)
        in_specs.append(pl.BlockSpec((fd, D), lambda i: (0, 0)))   # resident
        args.append(smat)

    if reduce_sum:
        kernel = (_fm_reduced_mxu_kernel if use_mxu else
                  functools.partial(_fm_reduced_slice_kernel,
                                    num_fields=F, embed_dim=D))
        out_shape = jax.ShapeDtypeStruct((B, 1), x.dtype)
        out_spec = pl.BlockSpec((TB, 1), lambda i: (i, 0))
        out_bytes = B * itemsize
    else:
        kernel = (_fm_full_mxu_kernel if use_mxu else
                  functools.partial(_fm_full_slice_kernel,
                                    num_fields=F, embed_dim=D))
        out_shape = jax.ShapeDtypeStruct((B, D), x.dtype)
        out_spec = pl.BlockSpec((TB, D), lambda i: (i, 0))
        out_bytes = B * D * itemsize

    mm_flops = 2 * B * fd * D * (1 if reduce_sum else 2) if use_mxu else 0
    cost = pl.CostEstimate(
        flops=int(B * (4 * fd + 3 * D) + mm_flops),
        transcendentals=0,
        bytes_accessed=int(B * fd * itemsize + out_bytes
                           + (smat_bytes if use_mxu else 0)),
    )

    dims = (pltpu.CORE_PARALLEL,) if core_parallel else ("parallel",)

    return pl.pallas_call(
        kernel,
        out_shape=out_shape,
        grid_spec=pltpu.PrefetchScalarGridSpec(
            num_scalar_prefetch=0,
            grid=grid,
            in_specs=in_specs,
            out_specs=out_spec,
        ),
        compiler_params=pltpu.CompilerParams(
            dimension_semantics=dims,
            vmem_limit_bytes=vmem_limit,
        ),
        cost_estimate=cost,
    )(*args)


def fm_reference(x, reduce_sum=True):
    square_of_sum = jnp.sum(x, axis=1) ** 2
    sum_of_square = jnp.sum(x ** 2, axis=1)
    ix = square_of_sum - sum_of_square
    if reduce_sum:
        ix = jnp.sum(ix, axis=1, keepdims=True)
    return 0.5 * ix


if __name__ == "__main__":
    key = jax.random.PRNGKey(0)

    # Typical FM shape: D=32 is not a multiple of 128 -> MXU field-sum path.
    batch, num_fields, embed_dim = 2, 4, 32
    x = jax.random.normal(key, (batch, num_fields, embed_dim), dtype=jnp.float32)

    out = fm_operation(x, reduce_sum=True)
    jax.block_until_ready(out)
    ref = fm_reference(x, reduce_sum=True)
    assert out.shape == (batch, 1), out.shape
    assert jnp.allclose(out, ref, atol=1e-4, rtol=1e-4), (out, ref)

    out_full = fm_operation(x, reduce_sum=False)
    jax.block_until_ready(out_full)
    ref_full = fm_reference(x, reduce_sum=False)
    assert out_full.shape == (batch, embed_dim), out_full.shape
    assert jnp.allclose(out_full, ref_full, atol=1e-4, rtol=1e-4)

    # Lane-aligned D=128 -> static-Ref-slice field-sum path.
    x_aligned = jax.random.normal(jax.random.PRNGKey(0), (4, 3, 128),
                                  dtype=jnp.float32)
    for rs in (True, False):
        o = fm_operation(x_aligned, reduce_sum=rs)
        jax.block_until_ready(o)
        r = fm_reference(x_aligned, reduce_sum=rs)
        assert jnp.allclose(o, r, atol=1e-3, rtol=1e-3), (rs, o, r)

    print("KERNEL_OK")
</pallas_src>

<mosaic_0001>
module attributes {stable_mosaic.version = 11 : i64} {
  func.func @_fm_reduced_mxu_kernel(%arg0: i32, %arg1: memref<2x128xf32, #tpu.memory_space<vmem>>, %arg2: memref<128x32xf32, #tpu.memory_space<vmem>>, %arg3: memref<2x1xf32, #tpu.memory_space<vmem>>) attributes {dimension_semantics = [#tpu.dimension_semantics<parallel>], iteration_bounds = array<i64: 1>, scalar_prefetch = 0 : i64, scratch_operands = 0 : i64, tpu.core_type = #tpu.core_type<tc>, window_params = [{transform_indices = @transform_0, window_bounds = array<i64: 2, 128>}, {pipeline_mode = #tpu.pipeline_mode<synchronous>, transform_indices = @transform_1, window_bounds = array<i64: 128, 32>}, {transform_indices = @transform_2, window_bounds = array<i64: 2, 1>}]} {
    %c0 = arith.constant 0 : index
    %c0_0 = arith.constant 0 : index
    %0 = vector.load %arg1[%c0, %c0_0] : memref<2x128xf32, #tpu.memory_space<vmem>>, vector<2x128xf32>
    %c0_1 = arith.constant 0 : index
    %c0_2 = arith.constant 0 : index
    %1 = vector.load %arg2[%c0_1, %c0_2] : memref<128x32xf32, #tpu.memory_space<vmem>>, vector<128x32xf32>
    %cst = arith.constant dense<0.000000e+00> : vector<2x32xf32>
    %2 = tpu.matmul %0, %1, %cst {dimension_numbers = #tpu.dot_dimension_numbers<[1], [0], [0], [1], [0, 0, 1, 1], [], []>, precision = #tpu.contract_precision<fp32>} : vector<2x128xf32>, vector<128x32xf32>, vector<2x32xf32> -> vector<2x32xf32>
    %3 = arith.mulf %0, %0 : vector<2x128xf32>
    %cst_3 = arith.constant dense<0.000000e+00> : vector<2xf32>
    %4 = vector.multi_reduction <add>, %3, %cst_3 [1] : vector<2x128xf32> to vector<2xf32>
    %5 = vector.shape_cast %4 : vector<2xf32> to vector<2x1xf32>
    %6 = arith.mulf %2, %2 : vector<2x32xf32>
    %cst_4 = arith.constant dense<0.000000e+00> : vector<2xf32>
    %7 = vector.multi_reduction <add>, %6, %cst_4 [1] : vector<2x32xf32> to vector<2xf32>
    %8 = vector.shape_cast %7 : vector<2xf32> to vector<2x1xf32>
    %9 = arith.subf %8, %5 : vector<2x1xf32>
    %cst_5 = arith.constant 5.000000e-01 : f32
    %10 = vector.broadcast %cst_5 : f32 to vector<2x1xf32>
    %11 = arith.mulf %10, %9 : vector<2x1xf32>
    %c0_6 = arith.constant 0 : index
    %c0_7 = arith.constant 0 : index
    %12 = vector.load %arg3[%c0_6, %c0_7] : memref<2x1xf32, #tpu.memory_space<vmem>>, vector<2x1xf32>
    tpu.vector_store %arg3[%c0_6, %c0_7], %11 {strides = array<i32>} : memref<2x1xf32, #tpu.memory_space<vmem>>, vector<2x1xf32>,
    return
  }
  func.func @transform_0(%arg0: i32) -> (i32, i32) {
    %c0_i32 = arith.constant 0 : i32
    %c0_i32_0 = arith.constant 0 : i32
    return %arg0, %c0_i32 : i32, i32
  }
  func.func @transform_1(%arg0: i32) -> (i32, i32) {
    %c0_i32 = arith.constant 0 : i32
    %c0_i32_0 = arith.constant 0 : i32
    %c0_i32_1 = arith.constant 0 : i32
    return %c0_i32, %c0_i32_0 : i32, i32
  }
  func.func @transform_2(%arg0: i32) -> (i32, i32) {
    %c0_i32 = arith.constant 0 : i32
    %c0_i32_0 = arith.constant 0 : i32
    return %arg0, %c0_i32 : i32, i32
  }
}

</mosaic_0001>

<llo_original>
// kernel: tpu_custom_call.1
$region0: #{tpu_custom_call.1}
  #allocation0 [shape = 'u32[]', space=smem, size = 0x4, offset = 0x4, fixed_abs, tag = 'smem constant byte address 0x4 - core index']
  #allocation1 [shape = 'u32[72,128]{1,0:T(1,128)}', space=vmem, size = 0x9000, scoped, tag = 'internal scratch']
  %s0 = inlined_call_operand.vmem [shape: f32[2,128], index: 0, kind: input, shape index: {}]
  %s1 = inlined_call_operand.vmem [shape: f32[128,32], index: 1, kind: input, shape index: {}]
  %s2 = inlined_call_operand.vmem [shape: f32[2,1], index: 2, kind: output, shape index: {}]
  %s3 = sld [smem:[#allocation0]]
  $region18: #{tpu_custom_call.1} parent=0
    _
  %s5 = ssub.s32 1, %s3
  %s6 = scalar_select 0, %s5, %s3
  // Predicated region
  $region2: #{tpu_custom_call.1} parent=0 // pred_check
    _
  $region3: #{tpu_custom_call.1} parent=0 // pred_check_branch
    %8 = sbr.rel (0) target = $region5
  $region4: #{tpu_custom_call.1} parent=0 // pred_region
    _
  $region5: #{tpu_custom_call.1} parent=0 // pred_fallthru
    _
  // Predicated region
  $region6: #{tpu_custom_call.1} parent=0 // pred_check
    _
  $region7: #{tpu_custom_call.1} parent=0 // pred_check_branch
    %10 = sbr.rel (0) target = $region9
  $region8: #{tpu_custom_call.1} parent=0 // pred_region
    _
  $region9: #{tpu_custom_call.1} parent=0 // pred_fallthru
    _
  %v11 = vld [vmem:[%s0] sm:$0x3]
  %v12 = vld [vmem:[%s1] sm:$0xff]
  %v13 = vld [vmem:[%s1 + $0x8] sm:$0xff]
  %v14 = vld [vmem:[%s1 + $0x10] sm:$0xff]
  %v15 = vld [vmem:[%s1 + $0x18] sm:$0xff]
  %v16 = vld [vmem:[%s1 + $0x20] sm:$0xff]
  %v17 = vld [vmem:[%s1 + $0x28] sm:$0xff]
  %v18 = vld [vmem:[%s1 + $0x30] sm:$0xff]
  %v19 = vld [vmem:[%s1 + $0x38] sm:$0xff]
  %v20 = vld [vmem:[%s1 + $0x40] sm:$0xff]
  %v21 = vld [vmem:[%s1 + $0x48] sm:$0xff]
  %v22 = vld [vmem:[%s1 + $0x50] sm:$0xff]
  %v23 = vld [vmem:[%s1 + $0x58] sm:$0xff]
  %v24 = vld [vmem:[%s1 + $0x60] sm:$0xff]
  %v25 = vld [vmem:[%s1 + $0x68] sm:$0xff]
  %v26 = vld [vmem:[%s1 + $0x70] sm:$0xff]
  %v27 = vld [vmem:[%s1 + $0x78] sm:$0xff]
  %v28 = vand.u32 %v27, 4294901760
  %29 = vmatpush.msra.mxu0 %v28
  %v30 = vand.u32 %v26, 4294901760
  %31 = vmatpush.msra.mxu0 %v30
  %v32 = vand.u32 %v25, 4294901760
  %33 = vmatpush.msra.mxu0 %v32
  %v34 = vand.u32 %v24, 4294901760
  %35 = vmatpush.msra.mxu0 %v34
  %v36 = vand.u32 %v23, 4294901760
  %37 = vmatpush.msra.mxu0 %v36
  %v38 = vand.u32 %v22, 4294901760
  %39 = vmatpush.msra.mxu0 %v38
  %v40 = vand.u32 %v21, 4294901760
  %41 = vmatpush.msra.mxu0 %v40
  %v42 = vand.u32 %v20, 4294901760
  %43 = vmatpush.msra.mxu0 %v42
  %v44 = vand.u32 %v19, 4294901760
  %45 = vmatpush.msra.mxu0 %v44
  %v46 = vand.u32 %v18, 4294901760
  %47 = vmatpush.msra.mxu0 %v46
  %v48 = vand.u32 %v17, 4294901760
  %49 = vmatpush.msra.mxu0 %v48
  %v50 = vand.u32 %v16, 4294901760
  %51 = vmatpush.msra.mxu0 %v50
  %v52 = vand.u32 %v15, 4294901760
  %53 = vmatpush.msra.mxu0 %v52
  %v54 = vand.u32 %v14, 4294901760
  %55 = vmatpush.msra.mxu0 %v54
  %v56 = vand.u32 %v13, 4294901760
  %57 = vmatpush.msra.mxu0 %v56
  %v58 = vand.u32 %v12, 4294901760
  %59 = vmatpush.msra.mxu0 %v58
  %v60 = vand.u32 %v11, 4294901760
  %v61 = vsub.f32 %v11, %v60
  %v62 = vand.u32 %v61, 4294901760
  %v63 = vsub.f32 %v61, %v62
  %v64 = vand.u32 %v63, 4294901760
  %65 = vmatmul.f32.gmra.mxu0 %v64
  %v66 = vpop.f32.mrf.mxu0
  %v67 = vadd.f32 0.0, %v66
  %68 = vdwg.mxu0
  %v69 = vand.u32 %v27, 4294901760
  %v70 = vsub.f32 %v27, %v69
  %v71 = vand.u32 %v70, 4294901760
  %v72 = vsub.f32 %v70, %v71
  %v73 = vand.u32 %v72, 4294901760
  %74 = vmatpush.msra.mxu0 %v73
  %v75 = vand.u32 %v26, 4294901760
  %v76 = vsub.f32 %v26, %v75
  %v77 = vand.u32 %v76, 4294901760
  %v78 = vsub.f32 %v76, %v77
  %v79 = vand.u32 %v78, 4294901760
  %80 = vmatpush.msra.mxu0 %v79
  %v81 = vand.u32 %v25, 4294901760
  %v82 = vsub.f32 %v25, %v81
  %v83 = vand.u32 %v82, 4294901760
  %v84 = vsub.f32 %v82, %v83
  %v85 = vand.u32 %v84, 4294901760
  %86 = vmatpush.msra.mxu0 %v85
  %v87 = vand.u32 %v24, 4294901760
  %v88 = vsub.f32 %v24, %v87
  %v89 = vand.u32 %v88, 4294901760
  %v90 = vsub.f32 %v88, %v89
  %v91 = vand.u32 %v90, 4294901760
  %92 = vmatpush.msra.mxu0 %v91
  %v93 = vand.u32 %v23, 4294901760
  %v94 = vsub.f32 %v23, %v93
  %v95 = vand.u32 %v94, 4294901760
  %v96 = vsub.f32 %v94, %v95
  %v97 = vand.u32 %v96, 4294901760
  %98 = vmatpush.msra.mxu0 %v97
  %v99 = vand.u32 %v22, 4294901760
  %v100 = vsub.f32 %v22, %v99
  %v101 = vand.u32 %v100, 4294901760
  %v102 = vsub.f32 %v100, %v101
  %v103 = vand.u32 %v102, 4294901760
  %104 = vmatpush.msra.mxu0 %v103
  %v105 = vand.u32 %v21, 4294901760
  %v106 = vsub.f32 %v21, %v105
  %v107 = vand.u32 %v106, 4294901760
  %v108 = vsub.f32 %v106, %v107
  %v109 = vand.u32 %v108, 4294901760
  %110 = vmatpush.msra.mxu0 %v109
  %v111 = vand.u32 %v20, 4294901760
  %v112 = vsub.f32 %v20, %v111
  %v113 = vand.u32 %v112, 4294901760
  %v114 = vsub.f32 %v112, %v113
  %v115 = vand.u32 %v114, 4294901760
  %116 = vmatpush.msra.mxu0 %v115
  %v117 = vand.u32 %v19, 4294901760
  %v118 = vsub.f32 %v19, %v117
  %v119 = vand.u32 %v118, 4294901760
  %v120 = vsub.f32 %v118, %v119
  %v121 = vand.u32 %v120, 4294901760
  %122 = vmatpush.msra.mxu0 %v121
  %v123 = vand.u32 %v18, 4294901760
  %v124 = vsub.f32 %v18, %v123
  %v125 = vand.u32 %v124, 4294901760
  %v126 = vsub.f32 %v124, %v125
  %v127 = vand.u32 %v126, 4294901760
  %128 = vmatpush.msra.mxu0 %v127
  %v129 = vand.u32 %v17, 4294901760
  %v130 = vsub.f32 %v17, %v129
  %v131 = vand.u32 %v130, 4294901760
  %v132 = vsub.f32 %v130, %v131
  %v133 = vand.u32 %v132, 4294901760
  %134 = vmatpush.msra.mxu0 %v133
  %v135 = vand.u32 %v16, 4294901760
  %v136 = vsub.f32 %v16, %v135
  %v137 = vand.u32 %v136, 4294901760
  %v138 = vsub.f32 %v136, %v137
  %v139 = vand.u32 %v138, 4294901760
  %140 = vmatpush.msra.mxu0 %v139
  %v141 = vand.u32 %v15, 4294901760
  %v142 = vsub.f32 %v15, %v141
  %v143 = vand.u32 %v142, 4294901760
  %v144 = vsub.f32 %v142, %v143
  %v145 = vand.u32 %v144, 4294901760
  %146 = vmatpush.msra.mxu0 %v145
  %v147 = vand.u32 %v14, 4294901760
  %v148 = vsub.f32 %v14, %v147
  %v149 = vand.u32 %v148, 4294901760
  %v150 = vsub.f32 %v148, %v149
  %v151 = vand.u32 %v150, 4294901760
  %152 = vmatpush.msra.mxu0 %v151
  %v153 = vand.u32 %v13, 4294901760
  %v154 = vsub.f32 %v13, %v153
  %v155 = vand.u32 %v154, 4294901760
  %v156 = vsub.f32 %v154, %v155
  %v157 = vand.u32 %v156, 4294901760
  %158 = vmatpush.msra.mxu0 %v157
  %v159 = vand.u32 %v12, 4294901760
  %v160 = vsub.f32 %v12, %v159
  %v161 = vand.u32 %v160, 4294901760
  %v162 = vsub.f32 %v160, %v161
  %v163 = vand.u32 %v162, 4294901760
  %164 = vmatpush.msra.mxu0 %v163
  %v165 = vand.u32 %v11, 4294901760
  %166 = vmatmul.f32.gmra.mxu0 %v165
  %v167 = vpop.f32.mrf.mxu0
  %v168 = vadd.f32 %v67, %v167
  %169 = vdwg.mxu0
  %v170 = vand.u32 %v27, 4294901760
  %v171 = vsub.f32 %v27, %v170
  %172 = vmatpush.msra.mxu0 %v171
  %v173 = vand.u32 %v26, 4294901760
  %v174 = vsub.f32 %v26, %v173
  %175 = vmatpush.msra.mxu0 %v174
  %v176 = vand.u32 %v25, 4294901760
  %v177 = vsub.f32 %v25, %v176
  %178 = vmatpush.msra.mxu0 %v177
  %v179 = vand.u32 %v24, 4294901760
  %v180 = vsub.f32 %v24, %v179
  %181 = vmatpush.msra.mxu0 %v180
  %v182 = vand.u32 %v23, 4294901760
  %v183 = vsub.f32 %v23, %v182
  %184 = vmatpush.msra.mxu0 %v183
  %v185 = vand.u32 %v22, 4294901760
  %v186 = vsub.f32 %v22, %v185
  %187 = vmatpush.msra.mxu0 %v186
  %v188 = vand.u32 %v21, 4294901760
  %v189 = vsub.f32 %v21, %v188
  %190 = vmatpush.msra.mxu0 %v189
  %v191 = vand.u32 %v20, 4294901760
  %v192 = vsub.f32 %v20, %v191
  %193 = vmatpush.msra.mxu0 %v192
  %v194 = vand.u32 %v19, 4294901760
  %v195 = vsub.f32 %v19, %v194
  %196 = vmatpush.msra.mxu0 %v195
  %v197 = vand.u32 %v18, 4294901760
  %v198 = vsub.f32 %v18, %v197
  %199 = vmatpush.msra.mxu0 %v198
  %v200 = vand.u32 %v17, 4294901760
  %v201 = vsub.f32 %v17, %v200
  %202 = vmatpush.msra.mxu0 %v201
  %v203 = vand.u32 %v16, 4294901760
  %v204 = vsub.f32 %v16, %v203
  %205 = vmatpush.msra.mxu0 %v204
  %v206 = vand.u32 %v15, 4294901760
  %v207 = vsub.f32 %v15, %v206
  %208 = vmatpush.msra.mxu0 %v207
  %v209 = vand.u32 %v14, 4294901760
  %v210 = vsub.f32 %v14, %v209
  %211 = vmatpush.msra.mxu0 %v210
  %v212 = vand.u32 %v13, 4294901760
  %v213 = vsub.f32 %v13, %v212
  %214 = vmatpush.msra.mxu0 %v213
  %v215 = vand.u32 %v12, 4294901760
  %v216 = vsub.f32 %v12, %v215
  %217 = vmatpush.msra.mxu0 %v216
  %v218 = vand.u32 %v11, 4294901760
  %v219 = vsub.f32 %v11, %v218
  %220 = vmatmul.f32.gmra.mxu0 %v219
  %v221 = vpop.f32.mrf.mxu0
  %v222 = vadd.f32 %v168, %v221
  %223 = vdwg.mxu0
  %v224 = vand.u32 %v27, 4294901760
  %225 = vmatpush.msra.mxu0 %v224
  %v226 = vand.u32 %v26, 4294901760
  %227 = vmatpush.msra.mxu0 %v226
  %v228 = vand.u32 %v25, 4294901760
  %229 = vmatpush.msra.mxu0 %v228
  %v230 = vand.u32 %v24, 4294901760
  %231 = vmatpush.msra.mxu0 %v230
  %v232 = vand.u32 %v23, 4294901760
  %233 = vmatpush.msra.mxu0 %v232
  %v234 = vand.u32 %v22, 4294901760
  %235 = vmatpush.msra.mxu0 %v234
  %v236 = vand.u32 %v21, 4294901760
  %237 = vmatpush.msra.mxu0 %v236
  %v238 = vand.u32 %v20, 4294901760
  %239 = vmatpush.msra.mxu0 %v238
  %v240 = vand.u32 %v19, 4294901760
  %241 = vmatpush.msra.mxu0 %v240
  %v242 = vand.u32 %v18, 4294901760
  %243 = vmatpush.msra.mxu0 %v242
  %v244 = vand.u32 %v17, 4294901760
  %245 = vmatpush.msra.mxu0 %v244
  %v246 = vand.u32 %v16, 4294901760
  %247 = vmatpush.msra.mxu0 %v246
  %v248 = vand.u32 %v15, 4294901760
  %249 = vmatpush.msra.mxu0 %v248
  %v250 = vand.u32 %v14, 4294901760
  %251 = vmatpush.msra.mxu0 %v250
  %v252 = vand.u32 %v13, 4294901760
  %253 = vmatpush.msra.mxu0 %v252
  %v254 = vand.u32 %v12, 4294901760
  %255 = vmatpush.msra.mxu0 %v254
  %v256 = vand.u32 %v11, 4294901760
  %v257 = vsub.f32 %v11, %v256
  %v258 = vand.u32 %v257, 4294901760
  %259 = vmatmul.f32.gmra.mxu0 %v258
  %v260 = vpop.f32.mrf.mxu0
  %v261 = vadd.f32 %v222, %v260
  %262 = vdwg.mxu0
  %v263 = vand.u32 %v27, 4294901760
  %v264 = vsub.f32 %v27, %v263
  %v265 = vand.u32 %v264, 4294901760
  %266 = vmatpush.msra.mxu0 %v265
  %v267 = vand.u32 %v26, 4294901760
  %v268 = vsub.f32 %v26, %v267
  %v269 = vand.u32 %v268, 4294901760
  %270 = vmatpush.msra.mxu0 %v269
  %v271 = vand.u32 %v25, 4294901760
  %v272 = vsub.f32 %v25, %v271
  %v273 = vand.u32 %v272, 4294901760
  %274 = vmatpush.msra.mxu0 %v273
  %v275 = vand.u32 %v24, 4294901760
  %v276 = vsub.f32 %v24, %v275
  %v277 = vand.u32 %v276, 4294901760
  %278 = vmatpush.msra.mxu0 %v277
  %v279 = vand.u32 %v23, 4294901760
  %v280 = vsub.f32 %v23, %v279
  %v281 = vand.u32 %v280, 4294901760
  %282 = vmatpush.msra.mxu0 %v281
  %v283 = vand.u32 %v22, 4294901760
  %v284 = vsub.f32 %v22, %v283
  %v285 = vand.u32 %v284, 4294901760
  %286 = vmatpush.msra.mxu0 %v285
  %v287 = vand.u32 %v21, 4294901760
  %v288 = vsub.f32 %v21, %v287
  %v289 = vand.u32 %v288, 4294901760
  %290 = vmatpush.msra.mxu0 %v289
  %v291 = vand.u32 %v20, 4294901760
  %v292 = vsub.f32 %v20, %v291
  %v293 = vand.u32 %v292, 4294901760
  %294 = vmatpush.msra.mxu0 %v293
  %v295 = vand.u32 %v19, 4294901760
  %v296 = vsub.f32 %v19, %v295
  %v297 = vand.u32 %v296, 4294901760
  %298 = vmatpush.msra.mxu0 %v297
  %v299 = vand.u32 %v18, 4294901760
  %v300 = vsub.f32 %v18, %v299
  %v301 = vand.u32 %v300, 4294901760
  %302 = vmatpush.msra.mxu0 %v301
  %v303 = vand.u32 %v17, 4294901760
  %v304 = vsub.f32 %v17, %v303
  %v305 = vand.u32 %v304, 4294901760
  %306 = vmatpush.msra.mxu0 %v305
  %v307 = vand.u32 %v16, 4294901760
  %v308 = vsub.f32 %v16, %v307
  %v309 = vand.u32 %v308, 4294901760
  %310 = vmatpush.msra.mxu0 %v309
  %v311 = vand.u32 %v15, 4294901760
  %v312 = vsub.f32 %v15, %v311
  %v313 = vand.u32 %v312, 4294901760
  %314 = vmatpush.msra.mxu0 %v313
  %v315 = vand.u32 %v14, 4294901760
  %v316 = vsub.f32 %v14, %v315
  %v317 = vand.u32 %v316, 4294901760
  %318 = vmatpush.msra.mxu0 %v317
  %v319 = vand.u32 %v13, 4294901760
  %v320 = vsub.f32 %v13, %v319
  %v321 = vand.u32 %v320, 4294901760
  %322 = vmatpush.msra.mxu0 %v321
  %v323 = vand.u32 %v12, 4294901760
  %v324 = vsub.f32 %v12, %v323
  %v325 = vand.u32 %v324, 4294901760
  %326 = vmatpush.msra.mxu0 %v325
  %v327 = vand.u32 %v11, 4294901760
  %328 = vmatmul.f32.gmra.mxu0 %v327
  %v329 = vpop.f32.mrf.mxu0
  %v330 = vadd.f32 %v261, %v329
  %331 = vdwg.mxu0
  %v332 = vand.u32 %v27, 4294901760
  %333 = vmatpush.msra.mxu0 %v332
  %v334 = vand.u32 %v26, 4294901760
  %335 = vmatpush.msra.mxu0 %v334
  %v336 = vand.u32 %v25, 4294901760
  %337 = vmatpush.msra.mxu0 %v336
  %v338 = vand.u32 %v24, 4294901760
  %339 = vmatpush.msra.mxu0 %v338
  %v340 = vand.u32 %v23, 4294901760
  %341 = vmatpush.msra.mxu0 %v340
  %v342 = vand.u32 %v22, 4294901760
  %343 = vmatpush.msra.mxu0 %v342
  %v344 = vand.u32 %v21, 4294901760
  %345 = vmatpush.msra.mxu0 %v344
  %v346 = vand.u32 %v20, 4294901760
  %347 = vmatpush.msra.mxu0 %v346
  %v348 = vand.u32 %v19, 4294901760
  %349 = vmatpush.msra.mxu0 %v348
  %v350 = vand.u32 %v18, 4294901760
  %351 = vmatpush.msra.mxu0 %v350
  %v352 = vand.u32 %v17, 4294901760
  %353 = vmatpush.msra.mxu0 %v352
  %v354 = vand.u32 %v16, 4294901760
  %355 = vmatpush.msra.mxu0 %v354
  %v356 = vand.u32 %v15, 4294901760
  %357 = vmatpush.msra.mxu0 %v356
  %v358 = vand.u32 %v14, 4294901760
  %359 = vmatpush.msra.mxu0 %v358
  %v360 = vand.u32 %v13, 4294901760
  %361 = vmatpush.msra.mxu0 %v360
  %v362 = vand.u32 %v12, 4294901760
  %363 = vmatpush.msra.mxu0 %v362
  %v364 = vand.u32 %v11, 4294901760
  %365 = vmatmul.f32.gmra.mxu0 %v364
  %v366 = vpop.f32.mrf.mxu0
  %v367 = vadd.f32 %v330, %v366
  %368 = vdwg.mxu0
  %v369 = vmul.f32 %v11, %v11
  %vm370 = vcmask 1041408
  %v371 = vsel %vm370, %v369, 0.0
  %372 = vadd.xlane.f32.xlu0 %v371
  %v373 = vpop.xlane.xlu0 %372
  %v374 = vmul.f32 %v367, %v367
  %vm375 = vcmask 254976
  %v376 = vsel %vm375, %v374, 0.0
  %377 = vadd.xlane.f32.xlu0 %v376
  %v378 = vpop.xlane.xlu0 %377
  %v379 = vsub.f32 %v378, %v373
  %v380 = vmul.f32 %v379, 0.5
  %vm381 = vcmask 1024
  %382 = vst.msk [vmem:[%s2] sm:$0x3] %vm381, %v380
  // Predicated region
  $region10: #{tpu_custom_call.1} parent=0 // pred_check
    _
  $region11: #{tpu_custom_call.1} parent=0 // pred_check_branch
    %384 = sbr.rel (0) target = $region13
  $region12: #{tpu_custom_call.1} parent=0 // pred_region
    _
  $region13: #{tpu_custom_call.1} parent=0 // pred_fallthru
    _
  // Predicated region
  $region14: #{tpu_custom_call.1} parent=0 // pred_check
    _
  $region15: #{tpu_custom_call.1} parent=0 // pred_check_branch
    %386 = sbr.rel (0) target = $region17
  $region16: #{tpu_custom_call.1} parent=0 // pred_region
    _
  $region17: #{tpu_custom_call.1} parent=0 // pred_fallthru
    _

</llo_original>
